<compile_context>
chip_gen: v7x
topology: tpu7x:2x2x1
jax: 0.10.0
libtpu: 0.0.40
codegen_flags: <defaults>
</compile_context>

<pallas_src>
import functools

import jax
import jax.numpy as jnp
from jax import lax
from jax.experimental import pallas as pl
from jax.experimental.pallas import tpu as pltpu


def _residual_block_kernel(x_ref, w_ref, b_ref, g_ref, beta_ref, o_ref, u_ref,
                           *, kernel_size, n_blocks):
    """One batch-block (BB batch elements) per grid step, channels-last.

    x_ref    : (BB, T, D)     input block
    w_ref    : (N, K*D, D)    conv weight slabs (tap-major), MXU dtype, resident
    b_ref    : (N, 1, D)      conv biases (f32), resident
    g_ref    : (N, 1, D)      LayerNorm gammas (f32), resident
    beta_ref : (N, 1, D)      LayerNorm betas (f32), resident
    o_ref    : (BB, T, D)     output block
    u_ref    : (BB, T, K*D)   unfolded-LHS ("im2col") scratch, MXU dtype
    """
    BB, T, D = x_ref.shape
    K = kernel_size
    pad = (K - 1) // 2
    M = BB * T

    # Zero the halo rows of the shifted taps once per grid step.  They are never
    # touched by the data stores below and are identical for every ConvBlock.
    for k in range(K):
        d = k - pad
        c0, c1 = k * D, (k + 1) * D
        if d > 0:
            u_ref[:, T - d:T, c0:c1] = jnp.zeros((BB, d, D), u_ref.dtype)
        elif d < 0:
            u_ref[:, 0:-d, c0:c1] = jnp.zeros((BB, -d, D), u_ref.dtype)

    h = None
    for n in range(n_blocks):  # static unroll over ConvBlocks
        # Activation (ReLU).  Dropout(p=0.1) is identity in eval mode.
        # TODO(synk): training-mode dropout (p=0.1) is not implemented.
        src = x_ref[...].astype(jnp.float32) if n == 0 else h
        a = jnp.maximum(src, 0.0).astype(u_ref.dtype)            # (BB, T, D)

        # Unfold: U[b, t, k*D:(k+1)*D] = a[b, t + k - pad]  (zero outside [0, T)).
        # One 128-lane-aligned column-slab store per tap; center tap fully aligned.
        for k in range(K):
            d = k - pad
            c0, c1 = k * D, (k + 1) * D
            if d == 0:
                u_ref[:, :, c0:c1] = a
            elif d > 0:
                u_ref[:, 0:T - d, c0:c1] = a[:, d:T, :]
            else:
                u_ref[:, -d:T, c0:c1] = a[:, 0:T + d, :]

        # Conv1d('same') as ONE K*D-deep MXU contraction, f32 accumulation.
        acc = jnp.dot(u_ref[...].reshape(M, K * D), w_ref[n],
                      preferred_element_type=jnp.float32).reshape(BB, T, D)
        acc = acc + b_ref[n].astype(jnp.float32)                  # bias added once

        # LayerNorm over the hidden (last) dim: one-pass f32 stats, eps = 1e-5.
        mean = jnp.mean(acc, axis=-1, keepdims=True)
        var = jnp.mean(acc * acc, axis=-1, keepdims=True) - mean * mean
        h = ((acc - mean) * lax.rsqrt(jnp.maximum(var, 0.0) + 1e-5)
             * g_ref[n].astype(jnp.float32) + beta_ref[n].astype(jnp.float32))

    # Residual: re-read the input block (still resident in its VMEM pipeline
    # buffer) instead of keeping an f32 copy live across the whole stack.
    o_ref[...] = (x_ref[...].astype(jnp.float32) + h).astype(o_ref.dtype)


def _pick_batch_block(batch, t_len, target_rows=256, max_rows=1024):
    """Batch elements per grid step (must divide batch).

    Aims for M = BB*T of ~128-256 rows per MXU call (amortizes weight push and
    result drain) while capping the per-step VMEM footprint.  At the demo sizes
    (B=2, T=16) this collapses everything into a single grid step; for larger B
    it naturally leaves >= 2 "parallel" grid steps so both v7x TensorCores work.
    """
    best = 1
    for bb in range(1, batch + 1):
        if batch % bb != 0 or bb * t_len > max_rows:
            continue
        best = bb
        if bb * t_len >= target_rows:
            break
    return best


def residual_block(x_bdt, conv_w, conv_b, ln_g, ln_b, kernel_size,
                   *, mxu_dtype=jnp.bfloat16, batch_block=None):
    """x_bdt: (B, D, T) like PyTorch.  conv_w: (N, D_out, D_in, K)."""
    B, D, T = x_bdt.shape
    N = conv_w.shape[0]
    K = kernel_size
    if K % 2 != 1:
        raise ValueError("kernel_size must be odd for 'same' padding "
                         "(matches PyTorch padding=(K-1)//2).")

    BB = batch_block if batch_block is not None else _pick_batch_block(B, T)
    if B % BB != 0:
        raise ValueError(f"batch_block={BB} must divide batch={B}")

    # Layout plumbing.  TODO(synk): at real sizes keep the model channels-last
    # end-to-end (or fold the transpose into the kernel on the XLU) so these two
    # full HBM round trips disappear.
    x_btd = jnp.transpose(x_bdt, (0, 2, 1))                           # (B, T, D)
    # Conv weights as tap-major slabs: (N, K, D_in, D_out) -> (N, K*D_in, D_out).
    w_slab = jnp.transpose(conv_w, (0, 3, 2, 1)).reshape(N, K * D, D).astype(mxu_dtype)

    kernel = functools.partial(_residual_block_kernel, kernel_size=K, n_blocks=N)

    out_btd = pl.pallas_call(
        kernel,
        out_shape=jax.ShapeDtypeStruct((B, T, D), x_bdt.dtype),
        grid_spec=pltpu.PrefetchScalarGridSpec(
            num_scalar_prefetch=0,
            grid=(B // BB,),   # batch-block axis; fully independent work items
            in_specs=[
                # activations: BB batch elements per step, auto-pipelined
                pl.BlockSpec((BB, T, D), lambda i: (i, 0, 0)),
                # parameters: constant index_map -> fetched once, VMEM-resident.
                # (On v7x with large D, single-buffer these resident params via
                #  pipeline_mode=pl.Buffered(1) to halve their VMEM footprint.)
                pl.BlockSpec((N, K * D, D), lambda i: (0, 0, 0)),
                pl.BlockSpec((N, 1, D), lambda i: (0, 0, 0)),
                pl.BlockSpec((N, 1, D), lambda i: (0, 0, 0)),
                pl.BlockSpec((N, 1, D), lambda i: (0, 0, 0)),
            ],
            out_specs=pl.BlockSpec((BB, T, D), lambda i: (i, 0, 0)),
            # unfolded-LHS ("im2col") scratch, persistent across grid steps
            scratch_shapes=[pltpu.VMEM((BB, T, K * D), mxu_dtype)],
        ),
        compiler_params=pltpu.CompilerParams(
            # batch-block axis is embarrassingly parallel -> megacore sharding
            dimension_semantics=("parallel",),
            # fits the scoped-VMEM default on v5e/v6e/v7x at these tile sizes;
            # re-derive (and add T tiling) before growing T/D — v7x has 64 MiB.
            vmem_limit_bytes=32 * 1024 * 1024,
        ),
    )(
        x_btd,
        w_slab,
        conv_b.reshape(N, 1, D).astype(jnp.float32),
        ln_g.reshape(N, 1, D).astype(jnp.float32),
        ln_b.reshape(N, 1, D).astype(jnp.float32),
    )
    return jnp.transpose(out_btd, (0, 2, 1))                          # back to (B, D, T)


def reference_forward(x, conv_w, conv_b, ln_g, ln_b, kernel_size):
    """Pure-JAX reference (independent conv path via lax.conv)."""
    N = conv_w.shape[0]
    pad = (kernel_size - 1) // 2
    h = x
    for n in range(N):
        a = jnp.maximum(h, 0.0)
        y = lax.conv_general_dilated(
            a, conv_w[n], window_strides=(1,), padding=[(pad, pad)],
            dimension_numbers=('NCH', 'OIH', 'NCH'))
        y = y + conv_b[n][None, :, None]
        yt = jnp.transpose(y, (0, 2, 1))
        mean = jnp.mean(yt, axis=-1, keepdims=True)
        var = jnp.mean((yt - mean) ** 2, axis=-1, keepdims=True)
        yt = (yt - mean) / jnp.sqrt(var + 1e-5) * ln_g[n] + ln_b[n]
        h = jnp.transpose(yt, (0, 2, 1))
    return x + h


if __name__ == "__main__":
    # ResidualBlock(hidden_sizes=[128, 128], kernel_size=3, activation="ReLU")
    # D = 128 keeps the hidden/lane axis dense (full 128-lane vregs).
    B, D, T = 2, 128, 16
    K = 3
    N = 2

    key = jax.random.PRNGKey(0)
    kx, kw, kb, kg, kbeta = jax.random.split(key, 5)

    x = jax.random.normal(kx, (B, D, T), jnp.float32)
    conv_w = 0.1 * jax.random.normal(kw, (N, D, D, K), jnp.float32)  # (out, in, K) per block
    conv_b = 0.1 * jax.random.normal(kb, (N, D), jnp.float32)
    ln_g = 1.0 + 0.05 * jax.random.normal(kg, (N, D), jnp.float32)
    ln_b = 0.05 * jax.random.normal(kbeta, (N, D), jnp.float32)

    ref = jax.block_until_ready(reference_forward(x, conv_w, conv_b, ln_g, ln_b, K))

    # Precision check: f32 MXU operands must match the reference tightly
    # (slightly loosened vs bit-level due to fused-tap matmul reassociation and
    #  one-pass LayerNorm variance).
    out_f32 = jax.block_until_ready(
        residual_block(x, conv_w, conv_b, ln_g, ln_b, K, mxu_dtype=jnp.float32))
    assert out_f32.shape == (B, D, T), out_f32.shape
    err_f32 = float(jnp.max(jnp.abs(out_f32 - ref)))
    assert jnp.allclose(out_f32, ref, atol=2e-4, rtol=2e-4), err_f32

    # Performance path: bf16 MXU operands, f32 accumulation + f32 LayerNorm stats.
    # (bf16 quantizes the inter-block activation once per ConvBlock — an
    #  intentional precision/speed tradeoff covered by the looser tolerance.)
    out_bf16 = jax.block_until_ready(
        residual_block(x, conv_w, conv_b, ln_g, ln_b, K, mxu_dtype=jnp.bfloat16))
    assert out_bf16.shape == (B, D, T), out_bf16.shape
    err_bf16 = float(jnp.max(jnp.abs(out_bf16 - ref)))
    assert jnp.allclose(out_bf16, ref, atol=5e-2, rtol=5e-2), err_bf16

    print("KERNEL_OK")
</pallas_src>

<mosaic_0001>
module attributes {stable_mosaic.version = 11 : i64} {
  func.func @_residual_block_kernel(%arg0: i32, %arg1: memref<2x16x128xf32, #tpu.memory_space<vmem>>, %arg2: memref<2x384x128xf32, #tpu.memory_space<vmem>>, %arg3: memref<2x1x128xf32, #tpu.memory_space<vmem>>, %arg4: memref<2x1x128xf32, #tpu.memory_space<vmem>>, %arg5: memref<2x1x128xf32, #tpu.memory_space<vmem>>, %arg6: memref<2x16x128xf32, #tpu.memory_space<vmem>>, %arg7: memref<2x16x384xf32, #tpu.memory_space<vmem>>) attributes {dimension_semantics = [#tpu.dimension_semantics<parallel>], iteration_bounds = array<i64: 1>, scalar_prefetch = 0 : i64, scratch_operands = 1 : i64, tpu.core_type = #tpu.core_type<tc>, window_params = [{transform_indices = @transform_0, window_bounds = array<i64: 2, 16, 128>}, {pipeline_mode = #tpu.pipeline_mode<synchronous>, transform_indices = @transform_1, window_bounds = array<i64: 2, 384, 128>}, {pipeline_mode = #tpu.pipeline_mode<synchronous>, transform_indices = @transform_2, window_bounds = array<i64: 2, 1, 128>}, {pipeline_mode = #tpu.pipeline_mode<synchronous>, transform_indices = @transform_3, window_bounds = array<i64: 2, 1, 128>}, {pipeline_mode = #tpu.pipeline_mode<synchronous>, transform_indices = @transform_4, window_bounds = array<i64: 2, 1, 128>}, {transform_indices = @transform_5, window_bounds = array<i64: 2, 16, 128>}]} {
    %cst = arith.constant 0.000000e+00 : f32
    %0 = vector.broadcast %cst : f32 to vector<2x1x128xf32>
    %c0 = arith.constant 0 : index
    %c0_0 = arith.constant 0 : index
    %c0_1 = arith.constant 0 : index
    %1 = vector.load %arg7[%c0, %c0_0, %c0_1] : memref<2x16x384xf32, #tpu.memory_space<vmem>>, vector<2x1x128xf32>
    tpu.vector_store %arg7[%c0, %c0_0, %c0_1], %0 {strides = array<i32>} : memref<2x16x384xf32, #tpu.memory_space<vmem>>, vector<2x1x128xf32>,
    %cst_2 = arith.constant 0.000000e+00 : f32
    %2 = vector.broadcast %cst_2 : f32 to vector<2x1x128xf32>
    %c0_3 = arith.constant 0 : index
    %c15 = arith.constant 15 : index
    %c256 = arith.constant 256 : index
    %3 = vector.load %arg7[%c0_3, %c15, %c256] : memref<2x16x384xf32, #tpu.memory_space<vmem>>, vector<2x1x128xf32>
    tpu.vector_store %arg7[%c0_3, %c15, %c256], %2 {strides = array<i32>} : memref<2x16x384xf32, #tpu.memory_space<vmem>>, vector<2x1x128xf32>,
    %c0_4 = arith.constant 0 : index
    %c0_5 = arith.constant 0 : index
    %c0_6 = arith.constant 0 : index
    %4 = vector.load %arg1[%c0_4, %c0_5, %c0_6] : memref<2x16x128xf32, #tpu.memory_space<vmem>>, vector<2x16x128xf32>
    %cst_7 = arith.constant 0.000000e+00 : f32
    %5 = vector.broadcast %cst_7 : f32 to vector<2x16x128xf32>
    %6 = arith.maximumf %4, %5 : vector<2x16x128xf32>
    %7 = vector.extract_strided_slice %6 {offsets = [0, 0, 0], sizes = [2, 15, 128], strides = [1, 1, 1]} : vector<2x16x128xf32> to vector<2x15x128xf32>
    %c0_8 = arith.constant 0 : index
    %c1 = arith.constant 1 : index
    %c0_9 = arith.constant 0 : index
    %8 = vector.load %arg7[%c0_8, %c1, %c0_9] : memref<2x16x384xf32, #tpu.memory_space<vmem>>, vector<2x15x128xf32>
    tpu.vector_store %arg7[%c0_8, %c1, %c0_9], %7 {strides = array<i32>} : memref<2x16x384xf32, #tpu.memory_space<vmem>>, vector<2x15x128xf32>,
    %c0_10 = arith.constant 0 : index
    %c0_11 = arith.constant 0 : index
    %c128 = arith.constant 128 : index
    %9 = vector.load %arg7[%c0_10, %c0_11, %c128] : memref<2x16x384xf32, #tpu.memory_space<vmem>>, vector<2x16x128xf32>
    tpu.vector_store %arg7[%c0_10, %c0_11, %c128], %6 {strides = array<i32>} : memref<2x16x384xf32, #tpu.memory_space<vmem>>, vector<2x16x128xf32>,
    %10 = vector.extract_strided_slice %6 {offsets = [0, 1, 0], sizes = [2, 15, 128], strides = [1, 1, 1]} : vector<2x16x128xf32> to vector<2x15x128xf32>
    %c0_12 = arith.constant 0 : index
    %c0_13 = arith.constant 0 : index
    %c256_14 = arith.constant 256 : index
    %11 = vector.load %arg7[%c0_12, %c0_13, %c256_14] : memref<2x16x384xf32, #tpu.memory_space<vmem>>, vector<2x15x128xf32>
    tpu.vector_store %arg7[%c0_12, %c0_13, %c256_14], %10 {strides = array<i32>} : memref<2x16x384xf32, #tpu.memory_space<vmem>>, vector<2x15x128xf32>,
    %c0_15 = arith.constant 0 : index
    %c0_16 = arith.constant 0 : index
    %c0_17 = arith.constant 0 : index
    %12 = vector.load %arg7[%c0_15, %c0_16, %c0_17] : memref<2x16x384xf32, #tpu.memory_space<vmem>>, vector<2x16x384xf32>
    %13 = vector.shape_cast %12 : vector<2x16x384xf32> to vector<32x384xf32>
    %c0_18 = arith.constant 0 : index
    %c0_19 = arith.constant 0 : index
    %c0_20 = arith.constant 0 : index
    %14 = vector.load %arg2[%c0_18, %c0_19, %c0_20] : memref<2x384x128xf32, #tpu.memory_space<vmem>>, vector<1x384x128xf32>
    %15 = vector.shape_cast %14 : vector<1x384x128xf32> to vector<384x128xf32>
    %cst_21 = arith.constant dense<0.000000e+00> : vector<32x128xf32>
    %16 = tpu.matmul %13, %15, %cst_21 {dimension_numbers = #tpu.dot_dimension_numbers<[1], [0], [0], [1], [0, 0, 1, 1], [], []>} : vector<32x384xf32>, vector<384x128xf32>, vector<32x128xf32> -> vector<32x128xf32>
    %17 = vector.shape_cast %16 : vector<32x128xf32> to vector<2x16x128xf32>
    %c0_22 = arith.constant 0 : index
    %c0_23 = arith.constant 0 : index
    %c0_24 = arith.constant 0 : index
    %18 = vector.load %arg3[%c0_22, %c0_23, %c0_24] : memref<2x1x128xf32, #tpu.memory_space<vmem>>, vector<1x1x128xf32>
    %19 = vector.shape_cast %18 : vector<1x1x128xf32> to vector<1x128xf32>
    %20 = vector.shape_cast %19 : vector<1x128xf32> to vector<1x1x128xf32>
    %21 = vector.broadcast %20 : vector<1x1x128xf32> to vector<2x16x128xf32>
    %22 = arith.addf %17, %21 : vector<2x16x128xf32>
    %cst_25 = arith.constant dense<0.000000e+00> : vector<2x16xf32>
    %23 = vector.multi_reduction <add>, %22, %cst_25 [2] : vector<2x16x128xf32> to vector<2x16xf32>
    %24 = vector.shape_cast %23 : vector<2x16xf32> to vector<2x16x1xf32>
    %cst_26 = arith.constant 1.280000e+02 : f32
    %25 = vector.broadcast %cst_26 : f32 to vector<2x16x1xf32>
    %26 = arith.divf %24, %25 : vector<2x16x1xf32>
    %27 = arith.mulf %22, %22 : vector<2x16x128xf32>
    %cst_27 = arith.constant dense<0.000000e+00> : vector<2x16xf32>
    %28 = vector.multi_reduction <add>, %27, %cst_27 [2] : vector<2x16x128xf32> to vector<2x16xf32>
    %29 = vector.shape_cast %28 : vector<2x16xf32> to vector<2x16x1xf32>
    %cst_28 = arith.constant 1.280000e+02 : f32
    %30 = vector.broadcast %cst_28 : f32 to vector<2x16x1xf32>
    %31 = arith.divf %29, %30 : vector<2x16x1xf32>
    %32 = arith.mulf %26, %26 : vector<2x16x1xf32>
    %33 = arith.subf %31, %32 : vector<2x16x1xf32>
    %34 = vector.broadcast %26 : vector<2x16x1xf32> to vector<2x16x128xf32>
    %35 = arith.subf %22, %34 : vector<2x16x128xf32>
    %cst_29 = arith.constant 0.000000e+00 : f32
    %36 = vector.broadcast %cst_29 : f32 to vector<2x16x1xf32>
    %37 = arith.maximumf %33, %36 : vector<2x16x1xf32>
    %cst_30 = arith.constant 9.99999974E-6 : f32
    %38 = vector.broadcast %cst_30 : f32 to vector<2x16x1xf32>
    %39 = arith.addf %37, %38 : vector<2x16x1xf32>
    %40 = math.rsqrt %39 : vector<2x16x1xf32>
    %41 = vector.broadcast %40 : vector<2x16x1xf32> to vector<2x16x128xf32>
    %42 = arith.mulf %35, %41 : vector<2x16x128xf32>
    %c0_31 = arith.constant 0 : index
    %c0_32 = arith.constant 0 : index
    %c0_33 = arith.constant 0 : index
    %43 = vector.load %arg4[%c0_31, %c0_32, %c0_33] : memref<2x1x128xf32, #tpu.memory_space<vmem>>, vector<1x1x128xf32>
    %44 = vector.shape_cast %43 : vector<1x1x128xf32> to vector<1x128xf32>
    %45 = vector.shape_cast %44 : vector<1x128xf32> to vector<1x1x128xf32>
    %46 = vector.broadcast %45 : vector<1x1x128xf32> to vector<2x16x128xf32>
    %47 = arith.mulf %42, %46 : vector<2x16x128xf32>
    %c0_34 = arith.constant 0 : index
    %c0_35 = arith.constant 0 : index
    %c0_36 = arith.constant 0 : index
    %48 = vector.load %arg5[%c0_34, %c0_35, %c0_36] : memref<2x1x128xf32, #tpu.memory_space<vmem>>, vector<1x1x128xf32>
    %49 = vector.shape_cast %48 : vector<1x1x128xf32> to vector<1x128xf32>
    %50 = vector.shape_cast %49 : vector<1x128xf32> to vector<1x1x128xf32>
    %51 = vector.broadcast %50 : vector<1x1x128xf32> to vector<2x16x128xf32>
    %52 = arith.addf %47, %51 : vector<2x16x128xf32>
    %cst_37 = arith.constant 0.000000e+00 : f32
    %53 = vector.broadcast %cst_37 : f32 to vector<2x16x128xf32>
    %54 = arith.maximumf %52, %53 : vector<2x16x128xf32>
    %55 = vector.extract_strided_slice %54 {offsets = [0, 0, 0], sizes = [2, 15, 128], strides = [1, 1, 1]} : vector<2x16x128xf32> to vector<2x15x128xf32>
    %c0_38 = arith.constant 0 : index
    %c1_39 = arith.constant 1 : index
    %c0_40 = arith.constant 0 : index
    %56 = vector.load %arg7[%c0_38, %c1_39, %c0_40] : memref<2x16x384xf32, #tpu.memory_space<vmem>>, vector<2x15x128xf32>
    tpu.vector_store %arg7[%c0_38, %c1_39, %c0_40], %55 {strides = array<i32>} : memref<2x16x384xf32, #tpu.memory_space<vmem>>, vector<2x15x128xf32>,
    %c0_41 = arith.constant 0 : index
    %c0_42 = arith.constant 0 : index
    %c128_43 = arith.constant 128 : index
    %57 = vector.load %arg7[%c0_41, %c0_42, %c128_43] : memref<2x16x384xf32, #tpu.memory_space<vmem>>, vector<2x16x128xf32>
    tpu.vector_store %arg7[%c0_41, %c0_42, %c128_43], %54 {strides = array<i32>} : memref<2x16x384xf32, #tpu.memory_space<vmem>>, vector<2x16x128xf32>,
    %58 = vector.extract_strided_slice %54 {offsets = [0, 1, 0], sizes = [2, 15, 128], strides = [1, 1, 1]} : vector<2x16x128xf32> to vector<2x15x128xf32>
    %c0_44 = arith.constant 0 : index
    %c0_45 = arith.constant 0 : index
    %c256_46 = arith.constant 256 : index
    %59 = vector.load %arg7[%c0_44, %c0_45, %c256_46] : memref<2x16x384xf32, #tpu.memory_space<vmem>>, vector<2x15x128xf32>
    tpu.vector_store %arg7[%c0_44, %c0_45, %c256_46], %58 {strides = array<i32>} : memref<2x16x384xf32, #tpu.memory_space<vmem>>, vector<2x15x128xf32>,
    %c0_47 = arith.constant 0 : index
    %c0_48 = arith.constant 0 : index
    %c0_49 = arith.constant 0 : index
    %60 = vector.load %arg7[%c0_47, %c0_48, %c0_49] : memref<2x16x384xf32, #tpu.memory_space<vmem>>, vector<2x16x384xf32>
    %61 = vector.shape_cast %60 : vector<2x16x384xf32> to vector<32x384xf32>
    %c1_50 = arith.constant 1 : index
    %c0_51 = arith.constant 0 : index
    %c0_52 = arith.constant 0 : index
    %62 = vector.load %arg2[%c1_50, %c0_51, %c0_52] : memref<2x384x128xf32, #tpu.memory_space<vmem>>, vector<1x384x128xf32>
    %63 = vector.shape_cast %62 : vector<1x384x128xf32> to vector<384x128xf32>
    %cst_53 = arith.constant dense<0.000000e+00> : vector<32x128xf32>
    %64 = tpu.matmul %61, %63, %cst_53 {dimension_numbers = #tpu.dot_dimension_numbers<[1], [0], [0], [1], [0, 0, 1, 1], [], []>} : vector<32x384xf32>, vector<384x128xf32>, vector<32x128xf32> -> vector<32x128xf32>
    %65 = vector.shape_cast %64 : vector<32x128xf32> to vector<2x16x128xf32>
    %c1_54 = arith.constant 1 : index
    %c0_55 = arith.constant 0 : index
    %c0_56 = arith.constant 0 : index
    %66 = vector.load %arg3[%c1_54, %c0_55, %c0_56] : memref<2x1x128xf32, #tpu.memory_space<vmem>>, vector<1x1x128xf32>
    %67 = vector.shape_cast %66 : vector<1x1x128xf32> to vector<1x128xf32>
    %68 = vector.shape_cast %67 : vector<1x128xf32> to vector<1x1x128xf32>
    %69 = vector.broadcast %68 : vector<1x1x128xf32> to vector<2x16x128xf32>
    %70 = arith.addf %65, %69 : vector<2x16x128xf32>
    %cst_57 = arith.constant dense<0.000000e+00> : vector<2x16xf32>
    %71 = vector.multi_reduction <add>, %70, %cst_57 [2] : vector<2x16x128xf32> to vector<2x16xf32>
    %72 = vector.shape_cast %71 : vector<2x16xf32> to vector<2x16x1xf32>
    %cst_58 = arith.constant 1.280000e+02 : f32
    %73 = vector.broadcast %cst_58 : f32 to vector<2x16x1xf32>
    %74 = arith.divf %72, %73 : vector<2x16x1xf32>
    %75 = arith.mulf %70, %70 : vector<2x16x128xf32>
    %cst_59 = arith.constant dense<0.000000e+00> : vector<2x16xf32>
    %76 = vector.multi_reduction <add>, %75, %cst_59 [2] : vector<2x16x128xf32> to vector<2x16xf32>
    %77 = vector.shape_cast %76 : vector<2x16xf32> to vector<2x16x1xf32>
    %cst_60 = arith.constant 1.280000e+02 : f32
    %78 = vector.broadcast %cst_60 : f32 to vector<2x16x1xf32>
    %79 = arith.divf %77, %78 : vector<2x16x1xf32>
    %80 = arith.mulf %74, %74 : vector<2x16x1xf32>
    %81 = arith.subf %79, %80 : vector<2x16x1xf32>
    %82 = vector.broadcast %74 : vector<2x16x1xf32> to vector<2x16x128xf32>
    %83 = arith.subf %70, %82 : vector<2x16x128xf32>
    %cst_61 = arith.constant 0.000000e+00 : f32
    %84 = vector.broadcast %cst_61 : f32 to vector<2x16x1xf32>
    %85 = arith.maximumf %81, %84 : vector<2x16x1xf32>
    %cst_62 = arith.constant 9.99999974E-6 : f32
    %86 = vector.broadcast %cst_62 : f32 to vector<2x16x1xf32>
    %87 = arith.addf %85, %86 : vector<2x16x1xf32>
    %88 = math.rsqrt %87 : vector<2x16x1xf32>
    %89 = vector.broadcast %88 : vector<2x16x1xf32> to vector<2x16x128xf32>
    %90 = arith.mulf %83, %89 : vector<2x16x128xf32>
    %c1_63 = arith.constant 1 : index
    %c0_64 = arith.constant 0 : index
    %c0_65 = arith.constant 0 : index
    %91 = vector.load %arg4[%c1_63, %c0_64, %c0_65] : memref<2x1x128xf32, #tpu.memory_space<vmem>>, vector<1x1x128xf32>
    %92 = vector.shape_cast %91 : vector<1x1x128xf32> to vector<1x128xf32>
    %93 = vector.shape_cast %92 : vector<1x128xf32> to vector<1x1x128xf32>
    %94 = vector.broadcast %93 : vector<1x1x128xf32> to vector<2x16x128xf32>
    %95 = arith.mulf %90, %94 : vector<2x16x128xf32>
    %c1_66 = arith.constant 1 : index
    %c0_67 = arith.constant 0 : index
    %c0_68 = arith.constant 0 : index
    %96 = vector.load %arg5[%c1_66, %c0_67, %c0_68] : memref<2x1x128xf32, #tpu.memory_space<vmem>>, vector<1x1x128xf32>
    %97 = vector.shape_cast %96 : vector<1x1x128xf32> to vector<1x128xf32>
    %98 = vector.shape_cast %97 : vector<1x128xf32> to vector<1x1x128xf32>
    %99 = vector.broadcast %98 : vector<1x1x128xf32> to vector<2x16x128xf32>
    %100 = arith.addf %95, %99 : vector<2x16x128xf32>
    %c0_69 = arith.constant 0 : index
    %c0_70 = arith.constant 0 : index
    %c0_71 = arith.constant 0 : index
    %101 = vector.load %arg1[%c0_69, %c0_70, %c0_71] : memref<2x16x128xf32, #tpu.memory_space<vmem>>, vector<2x16x128xf32>
    %102 = arith.addf %101, %100 : vector<2x16x128xf32>
    %c0_72 = arith.constant 0 : index
    %c0_73 = arith.constant 0 : index
    %c0_74 = arith.constant 0 : index
    %103 = vector.load %arg6[%c0_72, %c0_73, %c0_74] : memref<2x16x128xf32, #tpu.memory_space<vmem>>, vector<2x16x128xf32>
    tpu.vector_store %arg6[%c0_72, %c0_73, %c0_74], %102 {strides = array<i32>} : memref<2x16x128xf32, #tpu.memory_space<vmem>>, vector<2x16x128xf32>,
    return
  }
  func.func @transform_0(%arg0: i32) -> (i32, i32, i32) {
    %c0_i32 = arith.constant 0 : i32
    %c0_i32_0 = arith.constant 0 : i32
    %c0_i32_1 = arith.constant 0 : i32
    return %arg0, %c0_i32, %c0_i32_0 : i32, i32, i32
  }
  func.func @transform_1(%arg0: i32) -> (i32, i32, i32) {
    %c0_i32 = arith.constant 0 : i32
    %c0_i32_0 = arith.constant 0 : i32
    %c0_i32_1 = arith.constant 0 : i32
    %c0_i32_2 = arith.constant 0 : i32
    return %c0_i32, %c0_i32_0, %c0_i32_1 : i32, i32, i32
  }
  func.func @transform_2(%arg0: i32) -> (i32, i32, i32) {
    %c0_i32 = arith.constant 0 : i32
    %c0_i32_0 = arith.constant 0 : i32
    %c0_i32_1 = arith.constant 0 : i32
    %c0_i32_2 = arith.constant 0 : i32
    return %c0_i32, %c0_i32_0, %c0_i32_1 : i32, i32, i32
  }
  func.func @transform_3(%arg0: i32) -> (i32, i32, i32) {
    %c0_i32 = arith.constant 0 : i32
    %c0_i32_0 = arith.constant 0 : i32
    %c0_i32_1 = arith.constant 0 : i32
    %c0_i32_2 = arith.constant 0 : i32
    return %c0_i32, %c0_i32_0, %c0_i32_1 : i32, i32, i32
  }
  func.func @transform_4(%arg0: i32) -> (i32, i32, i32) {
    %c0_i32 = arith.constant 0 : i32
    %c0_i32_0 = arith.constant 0 : i32
    %c0_i32_1 = arith.constant 0 : i32
    %c0_i32_2 = arith.constant 0 : i32
    return %c0_i32, %c0_i32_0, %c0_i32_1 : i32, i32, i32
  }
  func.func @transform_5(%arg0: i32) -> (i32, i32, i32) {
    %c0_i32 = arith.constant 0 : i32
    %c0_i32_0 = arith.constant 0 : i32
    %c0_i32_1 = arith.constant 0 : i32
    return %arg0, %c0_i32, %c0_i32_0 : i32, i32, i32
  }
}

</mosaic_0001>

<llo_original>
// kernel: tpu_custom_call.1
$region0: #{tpu_custom_call.1}
  #allocation0 [shape = 'u32[]', space=smem, size = 0x4, offset = 0x4, fixed_abs, tag = 'smem constant byte address 0x4 - core index']
  #allocation1 [shape = 'u32[144,128]{1,0:T(1,128)}', space=vmem, size = 0x12000, scoped, tag = 'internal scratch']
  #allocation2 [shape = 'f32[2,16,384]{2,1,0:T(8,128)}', space=vmem, size = 0xc000, scoped, tag = 'scratch operand']
  %s0 = inlined_call_operand.hbm [shape: f32[2,16,128], index: 0, kind: input, shape index: {}]
  %s1 = inlined_call_operand.hbm [shape: f32[2,384,128], index: 1, kind: input, shape index: {}]
  %s2 = inlined_call_operand.vmem [shape: f32[2,1,128], index: 2, kind: input, shape index: {}]
  %s3 = inlined_call_operand.vmem [shape: f32[2,1,128], index: 3, kind: input, shape index: {}]
  %s4 = inlined_call_operand.vmem [shape: f32[2,1,128], index: 4, kind: input, shape index: {}]
  %s5 = inlined_call_operand.hbm [shape: f32[2,16,128], index: 5, kind: output, shape index: {}]
  %s6 = sld [smem:[#allocation0]]
  $region38: #{tpu_custom_call.1} parent=0
    _
  %s8 = ssub.s32 1, %s6
  %s9 = scalar_select 0, %s8, %s6
  $region1: #{tpu_custom_call.1} parent=0
    #allocation3 [shape = 'u8[16384]{0}', space=vmem, size = 0x4000, scoped, tag = 'input window, operand 0, single buffered']
    #allocation4 [shape = 's32[1]{0}', space=sflag, size = 0x4, scoped, tag = 'scoped memory for tpu_custom_call.1']
    #allocation5 [shape = 's32[1]{0}', space=sflag, size = 0x4, scoped, tag = 'scoped memory for tpu_custom_call.1']
    #allocation6 [shape = 'u8[393216]{0}', space=vmem, size = 0x60000, scoped, tag = 'input window, operand 1, single buffered']
    #allocation7 [shape = 's32[1]{0}', space=sflag, size = 0x4, scoped, tag = 'scoped memory for tpu_custom_call.1']
    #allocation8 [shape = 'u8[16384]{0}', space=vmem, size = 0x4000, scoped, tag = 'output window, operand 0, single buffered']
    %10 = vsyncpa [#allocation4], 0
    %11 = vsyncpa [#allocation7], 0
    %12 = vsyncpa [#allocation5], 0
    // Predicated region
    $region2: #{tpu_custom_call.1} parent=1 // pred_check
      _
    $region3: #{tpu_custom_call.1} parent=1 // pred_check_branch
      %14 = sbr.rel (0) target = $region5
    $region4: #{tpu_custom_call.1} parent=1 // pred_region
      %s16 = ssub.s32 512, 512
      %17 = vsyncadd [#allocation4], %s16
      %s18 = sshll.u32 [#allocation3], 4
      %s19 = int_to_ptr.vmem [resolvable:$true] %s18
      %24 = dma.hbm_to_vmem [thread:$0]  %s0, 512, %s19, [#allocation4], 128, 128, 8
    $region5: #{tpu_custom_call.1} parent=1 // pred_fallthru
      _
    // Predicated region
    $region6: #{tpu_custom_call.1} parent=1 // pred_check
      _
    $region7: #{tpu_custom_call.1} parent=1 // pred_check_branch
      %26 = sbr.rel (0) target = $region9
    $region8: #{tpu_custom_call.1} parent=1 // pred_region
      %s28 = ssub.s32 12288, 12288
      %29 = vsyncadd [#allocation7], %s28
      %s30 = sshll.u32 [#allocation6], 4
      %s31 = int_to_ptr.vmem [resolvable:$true] %s30
      %36 = dma.hbm_to_vmem [thread:$0]  %s1, 12288, %s31, [#allocation7], 128, 128, 8
    $region9: #{tpu_custom_call.1} parent=1 // pred_fallthru
      _
    // Predicated region
    $region10: #{tpu_custom_call.1} parent=1 // pred_check
      _
    $region11: #{tpu_custom_call.1} parent=1 // pred_check_branch
      %38 = sbr.rel (0) target = $region13
    $region12: #{tpu_custom_call.1} parent=1 // pred_region
      _
    $region13: #{tpu_custom_call.1} parent=1 // pred_fallthru
      _
    // Predicated region
    $region14: #{tpu_custom_call.1} parent=1 // pred_check
      _
    $region15: #{tpu_custom_call.1} parent=1 // pred_check_branch
      %40 = sbr.rel (0) target = $region17
    $region16: #{tpu_custom_call.1} parent=1 // pred_region
      _
    $region17: #{tpu_custom_call.1} parent=1 // pred_fallthru
      _
    // Predicated region
    $region18: #{tpu_custom_call.1} parent=1 // pred_check
      _
    $region19: #{tpu_custom_call.1} parent=1 // pred_check_branch
      %42 = sbr.rel (0) target = $region21
    $region20: #{tpu_custom_call.1} parent=1 // pred_region
      _
    $region21: #{tpu_custom_call.1} parent=1 // pred_fallthru
      _
    // Predicated region
    $region22: #{tpu_custom_call.1} parent=1 // pred_check
      _
    $region23: #{tpu_custom_call.1} parent=1 // pred_check_branch
      %44 = sbr.rel (0) target = $region25
    $region24: #{tpu_custom_call.1} parent=1 // pred_region
      %45 = dma.done [#allocation4], 512
    $region25: #{tpu_custom_call.1} parent=1 // pred_fallthru
      _
    // Predicated region
    $region26: #{tpu_custom_call.1} parent=1 // pred_check
      _
    $region27: #{tpu_custom_call.1} parent=1 // pred_check_branch
      %47 = sbr.rel (0) target = $region29
    $region28: #{tpu_custom_call.1} parent=1 // pred_region
      %48 = dma.done [#allocation7], 12288
    $region29: #{tpu_custom_call.1} parent=1 // pred_fallthru
      _
    %49 = vst [vmem:[#allocation2] sm:$0x1] 0.0
    %50 = vst [vmem:[#allocation2 + $0x30] sm:$0x1] 0.0
    %51 = vst [vmem:[#allocation2 + $0x2f] sm:$0x1] 0.0
    %52 = vst [vmem:[#allocation2 + $0x5f] sm:$0x1] 0.0
    %v53 = vld [vmem:[#allocation3] sm:$0xff]
    %v54 = vld [vmem:[#allocation3 + $0x8] sm:$0xff]
    %v55 = vld [vmem:[#allocation3 + $0x10] sm:$0xff]
    %v56 = vld [vmem:[#allocation3 + $0x18] sm:$0xff]
    %v57 = vmax.f32 %v53, 0.0
    %v58 = vmax.f32 %v54, 0.0
    %v59 = vmax.f32 %v55, 0.0
    %v60 = vmax.f32 %v56, 0.0
    %vm65 = vcmask 1040384
    %v66 = vrot.slane %v57, 7
    %v67 = vrot.slane %v58, 7
    %v68 = vsel %vm65, %v66, %v67
    %v69 = vrot.slane %v59, 7
    %v70 = vrot.slane %v60, 7
    %v71 = vsel %vm65, %v69, %v70
    %76 = vst [vmem:[#allocation2] sm:$0xfe] %v66
    %77 = vst [vmem:[#allocation2 + $0x18] sm:$0xff] %v68
    %78 = vst [vmem:[#allocation2 + $0x30] sm:$0xfe] %v69
    %79 = vst [vmem:[#allocation2 + $0x48] sm:$0xff] %v71
    %80 = vst [vmem:[#allocation2 + $0x8] sm:$0xff] %v57
    %81 = vst [vmem:[#allocation2 + $0x20] sm:$0xff] %v58
    %82 = vst [vmem:[#allocation2 + $0x38] sm:$0xff] %v59
    %83 = vst [vmem:[#allocation2 + $0x50] sm:$0xff] %v60
    %vm84 = vcmask 1046528
    %v85 = vrot.slane %v57, 1
    %v86 = vrot.slane %v58, 1
    %v87 = vsel %vm84, %v85, %v86
    %v88 = vrot.slane %v59, 1
    %v89 = vrot.slane %v60, 1
    %v90 = vsel %vm84, %v88, %v89
    %95 = vst [vmem:[#allocation2 + $0x10] sm:$0xff] %v87
    %96 = vst [vmem:[#allocation2 + $0x28] sm:$0x7f] %v86
    %97 = vst [vmem:[#allocation2 + $0x40] sm:$0xff] %v90
    %98 = vst [vmem:[#allocation2 + $0x58] sm:$0x7f] %v89
    %v99 = vld [vmem:[#allocation2] sm:$0xff]
    %v100 = vld [vmem:[#allocation2 + $0x8] sm:$0xff]
    %v101 = vld [vmem:[#allocation2 + $0x10] sm:$0xff]
    %v102 = vld [vmem:[#allocation2 + $0x18] sm:$0xff]
    %v103 = vld [vmem:[#allocation2 + $0x20] sm:$0xff]
    %v104 = vld [vmem:[#allocation2 + $0x28] sm:$0xff]
    %v105 = vld [vmem:[#allocation2 + $0x30] sm:$0xff]
    %v106 = vld [vmem:[#allocation2 + $0x38] sm:$0xff]
    %v107 = vld [vmem:[#allocation2 + $0x40] sm:$0xff]
    %v108 = vld [vmem:[#allocation2 + $0x48] sm:$0xff]
    %v109 = vld [vmem:[#allocation2 + $0x50] sm:$0xff]
    %v110 = vld [vmem:[#allocation2 + $0x58] sm:$0xff]
    %v111 = vld [vmem:[#allocation6] sm:$0xff]
    %v112 = vld [vmem:[#allocation6 + $0x8] sm:$0xff]
    %v113 = vld [vmem:[#allocation6 + $0x10] sm:$0xff]
    %v114 = vld [vmem:[#allocation6 + $0x18] sm:$0xff]
    %v115 = vld [vmem:[#allocation6 + $0x20] sm:$0xff]
    %v116 = vld [vmem:[#allocation6 + $0x28] sm:$0xff]
    %v117 = vld [vmem:[#allocation6 + $0x30] sm:$0xff]
    %v118 = vld [vmem:[#allocation6 + $0x38] sm:$0xff]
    %v119 = vld [vmem:[#allocation6 + $0x40] sm:$0xff]
    %v120 = vld [vmem:[#allocation6 + $0x48] sm:$0xff]
    %v121 = vld [vmem:[#allocation6 + $0x50] sm:$0xff]
    %v122 = vld [vmem:[#allocation6 + $0x58] sm:$0xff]
    %v123 = vld [vmem:[#allocation6 + $0x60] sm:$0xff]
    %v124 = vld [vmem:[#allocation6 + $0x68] sm:$0xff]
    %v125 = vld [vmem:[#allocation6 + $0x70] sm:$0xff]
    %v126 = vld [vmem:[#allocation6 + $0x78] sm:$0xff]
    %v127 = vld [vmem:[#allocation6 + $0x80] sm:$0xff]
    %v128 = vld [vmem:[#allocation6 + $0x88] sm:$0xff]
    %v129 = vld [vmem:[#allocation6 + $0x90] sm:$0xff]
    %v130 = vld [vmem:[#allocation6 + $0x98] sm:$0xff]
    %v131 = vld [vmem:[#allocation6 + $0xa0] sm:$0xff]
    %v132 = vld [vmem:[#allocation6 + $0xa8] sm:$0xff]
    %v133 = vld [vmem:[#allocation6 + $0xb0] sm:$0xff]
    %v134 = vld [vmem:[#allocation6 + $0xb8] sm:$0xff]
    %v135 = vld [vmem:[#allocation6 + $0xc0] sm:$0xff]
    %v136 = vld [vmem:[#allocation6 + $0xc8] sm:$0xff]
    %v137 = vld [vmem:[#allocation6 + $0xd0] sm:$0xff]
    %v138 = vld [vmem:[#allocation6 + $0xd8] sm:$0xff]
    %v139 = vld [vmem:[#allocation6 + $0xe0] sm:$0xff]
    %v140 = vld [vmem:[#allocation6 + $0xe8] sm:$0xff]
    %v141 = vld [vmem:[#allocation6 + $0xf0] sm:$0xff]
    %v142 = vld [vmem:[#allocation6 + $0xf8] sm:$0xff]
    %v143 = vld [vmem:[#allocation6 + $0x100] sm:$0xff]
    %v144 = vld [vmem:[#allocation6 + $0x108] sm:$0xff]
    %v145 = vld [vmem:[#allocation6 + $0x110] sm:$0xff]
    %v146 = vld [vmem:[#allocation6 + $0x118] sm:$0xff]
    %v147 = vld [vmem:[#allocation6 + $0x120] sm:$0xff]
    %v148 = vld [vmem:[#allocation6 + $0x128] sm:$0xff]
    %v149 = vld [vmem:[#allocation6 + $0x130] sm:$0xff]
    %v150 = vld [vmem:[#allocation6 + $0x138] sm:$0xff]
    %v151 = vld [vmem:[#allocation6 + $0x140] sm:$0xff]
    %v152 = vld [vmem:[#allocation6 + $0x148] sm:$0xff]
    %v153 = vld [vmem:[#allocation6 + $0x150] sm:$0xff]
    %v154 = vld [vmem:[#allocation6 + $0x158] sm:$0xff]
    %v155 = vld [vmem:[#allocation6 + $0x160] sm:$0xff]
    %v156 = vld [vmem:[#allocation6 + $0x168] sm:$0xff]
    %v157 = vld [vmem:[#allocation6 + $0x170] sm:$0xff]
    %v158 = vld [vmem:[#allocation6 + $0x178] sm:$0xff]
    %159 = vmatprep.subr.mxu0 0.0
    %160 = vmatpush1.msra.mxu0 %v111
    %161 = vmatprep.subr.mxu0 0.0
    %162 = vmatpush1.msra.mxu0 %v112
    %163 = vmatprep.subr.mxu0 0.0
    %164 = vmatpush1.msra.mxu0 %v113
    %165 = vmatprep.subr.mxu0 0.0
    %166 = vmatpush1.msra.mxu0 %v114
    %167 = vmatprep.subr.mxu0 0.0
    %168 = vmatpush1.msra.mxu0 %v115
    %169 = vmatprep.subr.mxu0 0.0
    %170 = vmatpush1.msra.mxu0 %v116
    %171 = vmatprep.subr.mxu0 0.0
    %172 = vmatpush1.msra.mxu0 %v117
    %173 = vmatprep.subr.mxu0 0.0
    %174 = vmatpush1.msra.mxu0 %v118
    %175 = vmatprep.subr.mxu0 0.0
    %176 = vmatpush1.msra.mxu0 %v119
    %177 = vmatprep.subr.mxu0 0.0
    %178 = vmatpush1.msra.mxu0 %v120
    %179 = vmatprep.subr.mxu0 0.0
    %180 = vmatpush1.msra.mxu0 %v121
    %181 = vmatprep.subr.mxu0 0.0
    %182 = vmatpush1.msra.mxu0 %v122
    %183 = vmatprep.subr.mxu0 0.0
    %184 = vmatpush1.msra.mxu0 %v123
    %185 = vmatprep.subr.mxu0 0.0
    %186 = vmatpush1.msra.mxu0 %v124
    %187 = vmatprep.subr.mxu0 0.0
    %188 = vmatpush1.msra.mxu0 %v125
    %189 = vmatprep.subr.mxu0 0.0
    %190 = vmatpush1.msra.mxu0 %v126
    %191 = vmatprep.subr.mxu0 0.0
    %192 = vmatpush1.msra.mxu0 %v127
    %193 = vmatprep.subr.mxu0 0.0
    %194 = vmatpush1.msra.mxu0 %v128
    %195 = vmatprep.subr.mxu0 0.0
    %196 = vmatpush1.msra.mxu0 %v129
    %197 = vmatprep.subr.mxu0 0.0
    %198 = vmatpush1.msra.mxu0 %v130
    %199 = vmatprep.subr.mxu0 0.0
    %200 = vmatpush1.msra.mxu0 %v131
    %201 = vmatprep.subr.mxu0 0.0
    %202 = vmatpush1.msra.mxu0 %v132
    %203 = vmatprep.subr.mxu0 0.0
    %204 = vmatpush1.msra.mxu0 %v133
    %205 = vmatprep.subr.mxu0 0.0
    %206 = vmatpush1.msra.mxu0 %v134
    %207 = vmatprep.subr.mxu0 0.0
    %208 = vmatpush1.msra.mxu0 %v135
    %209 = vmatprep.subr.mxu0 0.0
    %210 = vmatpush1.msra.mxu0 %v136
    %211 = vmatprep.subr.mxu0 0.0
    %212 = vmatpush1.msra.mxu0 %v137
    %213 = vmatprep.subr.mxu0 0.0
    %214 = vmatpush1.msra.mxu0 %v138
    %215 = vmatprep.subr.mxu0 0.0
    %216 = vmatpush1.msra.mxu0 %v139
    %217 = vmatprep.subr.mxu0 0.0
    %218 = vmatpush1.msra.mxu0 %v140
    %219 = vmatprep.subr.mxu0 0.0
    %220 = vmatpush1.msra.mxu0 %v141
    %221 = vmatprep.subr.mxu0 0.0
    %222 = vmatpush1.msra.mxu0 %v142
    %223 = vmatprep.mubr.f32.mxu0 %v100
    %224 = vmatmul.mubr.f32.gmra.mrb[0].mxu0 %v99
    %v225 = vpop.f32.mrb[0].mxu0
    %v226 = vadd.f32 0.0, %v225
    %v227 = vpop.f32.mrb[0].mxu0
    %228 = vmatprep.mubr.f32.mxu0 %v103
    %229 = vmatmul.mubr.f32.gmra.mrb[0].mxu0 %v102
    %v230 = vpop.f32.mrb[0].mxu0
    %v231 = vadd.f32 0.0, %v230
    %v232 = vpop.f32.mrb[0].mxu0
    %233 = vmatprep.mubr.f32.mxu0 %v106
    %234 = vmatmul.mubr.f32.gmra.mrb[0].mxu0 %v105
    %v235 = vpop.f32.mrb[0].mxu0
    %v236 = vadd.f32 0.0, %v235
    %v237 = vpop.f32.mrb[0].mxu0
    %238 = vmatprep.mubr.f32.mxu0 %v109
    %239 = vmatmul.mubr.f32.gmra.mrb[0].mxu0 %v108
    %v240 = vpop.f32.mrb[0].mxu0
    %v241 = vadd.f32 0.0, %v240
    %v242 = vpop.f32.mrb[0].mxu0
    %243 = vdwg.mxu0
    %244 = vmatprep.subr.mxu0 0.0
    %245 = vmatpush1.msra.mxu0 %v143
    %246 = vmatprep.subr.mxu0 0.0
    %247 = vmatpush1.msra.mxu0 %v144
    %248 = vmatprep.subr.mxu0 0.0
    %249 = vmatpush1.msra.mxu0 %v145
    %250 = vmatprep.subr.mxu0 0.0
    %251 = vmatpush1.msra.mxu0 %v146
    %252 = vmatprep.subr.mxu0 0.0
    %253 = vmatpush1.msra.mxu0 %v147
    %254 = vmatprep.subr.mxu0 0.0
    %255 = vmatpush1.msra.mxu0 %v148
    %256 = vmatprep.subr.mxu0 0.0
    %257 = vmatpush1.msra.mxu0 %v149
    %258 = vmatprep.subr.mxu0 0.0
    %259 = vmatpush1.msra.mxu0 %v150
    %260 = vmatprep.subr.mxu0 0.0
    %261 = vmatpush1.msra.mxu0 %v151
    %262 = vmatprep.subr.mxu0 0.0
    %263 = vmatpush1.msra.mxu0 %v152
    %264 = vmatprep.subr.mxu0 0.0
    %265 = vmatpush1.msra.mxu0 %v153
    %266 = vmatprep.subr.mxu0 0.0
    %267 = vmatpush1.msra.mxu0 %v154
    %268 = vmatprep.subr.mxu0 0.0
    %269 = vmatpush1.msra.mxu0 %v155
    %270 = vmatprep.subr.mxu0 0.0
    %271 = vmatpush1.msra.mxu0 %v156
    %272 = vmatprep.subr.mxu0 0.0
    %273 = vmatpush1.msra.mxu0 %v157
    %274 = vmatprep.subr.mxu0 0.0
    %275 = vmatpush1.msra.mxu0 %v158
    %276 = vmatprep.subr.mxu0 0.0
    %277 = vmatpush1.msra.mxu0 0.0
    %278 = vmatprep.subr.mxu0 0.0
    %279 = vmatpush1.msra.mxu0 0.0
    %280 = vmatprep.subr.mxu0 0.0
    %281 = vmatpush1.msra.mxu0 0.0
    %282 = vmatprep.subr.mxu0 0.0
    %283 = vmatpush1.msra.mxu0 0.0
    %284 = vmatprep.subr.mxu0 0.0
    %285 = vmatpush1.msra.mxu0 0.0
    %286 = vmatprep.subr.mxu0 0.0
    %287 = vmatpush1.msra.mxu0 0.0
    %288 = vmatprep.subr.mxu0 0.0
    %289 = vmatpush1.msra.mxu0 0.0
    %290 = vmatprep.subr.mxu0 0.0
    %291 = vmatpush1.msra.mxu0 0.0
    %292 = vmatprep.subr.mxu0 0.0
    %293 = vmatpush1.msra.mxu0 0.0
    %294 = vmatprep.subr.mxu0 0.0
    %295 = vmatpush1.msra.mxu0 0.0
    %296 = vmatprep.subr.mxu0 0.0
    %297 = vmatpush1.msra.mxu0 0.0
    %298 = vmatprep.subr.mxu0 0.0
    %299 = vmatpush1.msra.mxu0 0.0
    %300 = vmatprep.subr.mxu0 0.0
    %301 = vmatpush1.msra.mxu0 0.0
    %302 = vmatprep.subr.mxu0 0.0
    %303 = vmatpush1.msra.mxu0 0.0
    %304 = vmatprep.subr.mxu0 0.0
    %305 = vmatpush1.msra.mxu0 0.0
    %306 = vmatprep.subr.mxu0 0.0
    %307 = vmatpush1.msra.mxu0 0.0
    %308 = vmatprep.mubr.f32.mxu0 0.0
    %309 = vmatmul.mubr.f32.gmra.mrb[0].mxu0 %v101
    %v310 = vpop.f32.mrb[0].mxu0
    %v311 = vadd.f32 %v226, %v310
    %v312 = vpop.f32.mrb[0].mxu0
    %313 = vmatprep.mubr.f32.mxu0 0.0
    %314 = vmatmul.mubr.f32.gmra.mrb[0].mxu0 %v104
    %v315 = vpop.f32.mrb[0].mxu0
    %v316 = vadd.f32 %v231, %v315
    %v317 = vpop.f32.mrb[0].mxu0
    %318 = vmatprep.mubr.f32.mxu0 0.0
    %319 = vmatmul.mubr.f32.gmra.mrb[0].mxu0 %v107
    %v320 = vpop.f32.mrb[0].mxu0
    %v321 = vadd.f32 %v236, %v320
    %v322 = vpop.f32.mrb[0].mxu0
    %323 = vmatprep.mubr.f32.mxu0 0.0
    %324 = vmatmul.mubr.f32.gmra.mrb[0].mxu0 %v110
    %v325 = vpop.f32.mrb[0].mxu0
    %v326 = vadd.f32 %v241, %v325
    %v327 = vpop.f32.mrb[0].mxu0
    %328 = vdwg.mxu0
    %v329 = vld [vmem:[%s2] sm:$0x1]
    %v331 = vlaneseq
    %v332 = vshrl.u32 %v331, 7
    %v333 = vsub.s32 0, %v332
    %v334 = vrot.slane %v329, %v333
    %v336 = vadd.f32 %v311, %v334
    %v337 = vadd.f32 %v316, %v334
    %v338 = vadd.f32 %v321, %v334
    %v339 = vadd.f32 %v326, %v334
    %340 = vadd.xlane.f32.xlu0 %v336
    %v341 = vpop.xlane.xlu0 %340
    %342 = vadd.xlane.f32.xlu0 %v337
    %v343 = vpop.xlane.xlu0 %342
    %344 = vadd.xlane.f32.xlu0 %v338
    %v345 = vpop.xlane.xlu0 %344
    %346 = vadd.xlane.f32.xlu0 %v339
    %v347 = vpop.xlane.xlu0 %346
    %v348 = vrcp.pop 128.0
    %v349 = vmul.f32 %v341, %v348
    %v350 = vmul.f32 %v343, %v348
    %v351 = vmul.f32 %v345, %v348
    %v352 = vmul.f32 %v347, %v348
    %v353 = vmul.f32 %v336, %v336
    %v354 = vmul.f32 %v337, %v337
    %v355 = vmul.f32 %v338, %v338
    %v356 = vmul.f32 %v339, %v339
    %357 = vadd.xlane.f32.xlu0 %v353
    %v358 = vpop.xlane.xlu0 %357
    %359 = vadd.xlane.f32.xlu0 %v354
    %v360 = vpop.xlane.xlu0 %359
    %361 = vadd.xlane.f32.xlu0 %v355
    %v362 = vpop.xlane.xlu0 %361
    %363 = vadd.xlane.f32.xlu0 %v356
    %v364 = vpop.xlane.xlu0 %363
    %v365 = vmul.f32 %v358, %v348
    %v366 = vmul.f32 %v360, %v348
    %v367 = vmul.f32 %v362, %v348
    %v368 = vmul.f32 %v364, %v348
    %v369 = vmul.f32 %v349, %v349
    %v370 = vmul.f32 %v350, %v350
    %v371 = vmul.f32 %v351, %v351
    %v372 = vmul.f32 %v352, %v352
    %v373 = vsub.f32 %v365, %v369
    %v374 = vsub.f32 %v366, %v370
    %v375 = vsub.f32 %v367, %v371
    %v376 = vsub.f32 %v368, %v372
    %v377 = vsub.f32 %v336, %v349
    %v378 = vsub.f32 %v337, %v350
    %v379 = vsub.f32 %v338, %v351
    %v380 = vsub.f32 %v339, %v352
    %v381 = vmax.f32 %v373, 0.0
    %v382 = vmax.f32 %v374, 0.0
    %v383 = vmax.f32 %v375, 0.0
    %v384 = vmax.f32 %v376, 0.0
    %v385 = vadd.f32 %v381, 1e-05
    %v386 = vadd.f32 %v382, 1e-05
    %v387 = vadd.f32 %v383, 1e-05
    %v388 = vadd.f32 %v384, 1e-05
    %v389 = vrsqrt.pop %v385
    %v390 = vrsqrt.pop %v386
    %v391 = vrsqrt.pop %v387
    %v392 = vrsqrt.pop %v388
    %v393 = vmul.f32 %v377, %v389
    %v394 = vmul.f32 %v378, %v390
    %v395 = vmul.f32 %v379, %v391
    %v396 = vmul.f32 %v380, %v392
    %v397 = vld [vmem:[%s3] sm:$0x1]
    %v399 = vlaneseq
    %v400 = vshrl.u32 %v399, 7
    %v401 = vsub.s32 0, %v400
    %v402 = vrot.slane %v397, %v401
    %v404 = vmul.f32 %v393, %v402
    %v405 = vmul.f32 %v394, %v402
    %v406 = vmul.f32 %v395, %v402
    %v407 = vmul.f32 %v396, %v402
    %v408 = vld [vmem:[%s4] sm:$0x1]
    %v410 = vlaneseq
    %v411 = vshrl.u32 %v410, 7
    %v412 = vsub.s32 0, %v411
    %v413 = vrot.slane %v408, %v412
    %v415 = vadd.f32 %v404, %v413
    %v416 = vadd.f32 %v405, %v413
    %v417 = vadd.f32 %v406, %v413
    %v418 = vadd.f32 %v407, %v413
    %v419 = vmax.f32 %v415, 0.0
    %v420 = vmax.f32 %v416, 0.0
    %v421 = vmax.f32 %v417, 0.0
    %v422 = vmax.f32 %v418, 0.0
    %v427 = vrot.slane %v419, 7
    %v428 = vrot.slane %v420, 7
    %v429 = vsel %vm65, %v427, %v428
    %v430 = vrot.slane %v421, 7
    %v431 = vrot.slane %v422, 7
    %v432 = vsel %vm65, %v430, %v431
    %437 = vst [vmem:[#allocation2] sm:$0xfe] %v427
    %438 = vst [vmem:[#allocation2 + $0x18] sm:$0xff] %v429
    %439 = vst [vmem:[#allocation2 + $0x30] sm:$0xfe] %v430
    %440 = vst [vmem:[#allocation2 + $0x48] sm:$0xff] %v432
    %441 = vst [vmem:[#allocation2 + $0x8] sm:$0xff] %v419
    %442 = vst [vmem:[#allocation2 + $0x20] sm:$0xff] %v420
    %443 = vst [vmem:[#allocation2 + $0x38] sm:$0xff] %v421
    %444 = vst [vmem:[#allocation2 + $0x50] sm:$0xff] %v422
    %v445 = vrot.slane %v419, 1
    %v446 = vrot.slane %v420, 1
    %v447 = vsel %vm84, %v445, %v446
    %v448 = vrot.slane %v421, 1
    %v449 = vrot.slane %v422, 1
    %v450 = vsel %vm84, %v448, %v449
    %455 = vst [vmem:[#allocation2 + $0x10] sm:$0xff] %v447
    %456 = vst [vmem:[#allocation2 + $0x28] sm:$0x7f] %v446
    %457 = vst [vmem:[#allocation2 + $0x40] sm:$0xff] %v450
    %458 = vst [vmem:[#allocation2 + $0x58] sm:$0x7f] %v449
    %v459 = vld [vmem:[#allocation2] sm:$0xff]
    %v460 = vld [vmem:[#allocation2 + $0x8] sm:$0xff]
    %v461 = vld [vmem:[#allocation2 + $0x10] sm:$0xff]
    %v462 = vld [vmem:[#allocation2 + $0x18] sm:$0xff]
    %v463 = vld [vmem:[#allocation2 + $0x20] sm:$0xff]
    %v464 = vld [vmem:[#allocation2 + $0x28] sm:$0xff]
    %v465 = vld [vmem:[#allocation2 + $0x30] sm:$0xff]
    %v466 = vld [vmem:[#allocation2 + $0x38] sm:$0xff]
    %v467 = vld [vmem:[#allocation2 + $0x40] sm:$0xff]
    %v468 = vld [vmem:[#allocation2 + $0x48] sm:$0xff]
    %v469 = vld [vmem:[#allocation2 + $0x50] sm:$0xff]
    %v470 = vld [vmem:[#allocation2 + $0x58] sm:$0xff]
    %s471 = scalar_lea.vmem [#allocation6], 384
    %v472 = vld [vmem:[%s471] sm:$0xff]
    %v473 = vld [vmem:[%s471 + $0x8] sm:$0xff]
    %v474 = vld [vmem:[%s471 + $0x10] sm:$0xff]
    %v475 = vld [vmem:[%s471 + $0x18] sm:$0xff]
    %v476 = vld [vmem:[%s471 + $0x20] sm:$0xff]
    %v477 = vld [vmem:[%s471 + $0x28] sm:$0xff]
    %v478 = vld [vmem:[%s471 + $0x30] sm:$0xff]
    %v479 = vld [vmem:[%s471 + $0x38] sm:$0xff]
    %v480 = vld [vmem:[%s471 + $0x40] sm:$0xff]
    %v481 = vld [vmem:[%s471 + $0x48] sm:$0xff]
    %v482 = vld [vmem:[%s471 + $0x50] sm:$0xff]
    %v483 = vld [vmem:[%s471 + $0x58] sm:$0xff]
    %v484 = vld [vmem:[%s471 + $0x60] sm:$0xff]
    %v485 = vld [vmem:[%s471 + $0x68] sm:$0xff]
    %v486 = vld [vmem:[%s471 + $0x70] sm:$0xff]
    %v487 = vld [vmem:[%s471 + $0x78] sm:$0xff]
    %v488 = vld [vmem:[%s471 + $0x80] sm:$0xff]
    %v489 = vld [vmem:[%s471 + $0x88] sm:$0xff]
    %v490 = vld [vmem:[%s471 + $0x90] sm:$0xff]
    %v491 = vld [vmem:[%s471 + $0x98] sm:$0xff]
    %v492 = vld [vmem:[%s471 + $0xa0] sm:$0xff]
    %v493 = vld [vmem:[%s471 + $0xa8] sm:$0xff]
    %v494 = vld [vmem:[%s471 + $0xb0] sm:$0xff]
    %v495 = vld [vmem:[%s471 + $0xb8] sm:$0xff]
    %v496 = vld [vmem:[%s471 + $0xc0] sm:$0xff]
    %v497 = vld [vmem:[%s471 + $0xc8] sm:$0xff]
    %v498 = vld [vmem:[%s471 + $0xd0] sm:$0xff]
    %v499 = vld [vmem:[%s471 + $0xd8] sm:$0xff]
    %v500 = vld [vmem:[%s471 + $0xe0] sm:$0xff]
    %v501 = vld [vmem:[%s471 + $0xe8] sm:$0xff]
    %v502 = vld [vmem:[%s471 + $0xf0] sm:$0xff]
    %v503 = vld [vmem:[%s471 + $0xf8] sm:$0xff]
    %v504 = vld [vmem:[%s471 + $0x100] sm:$0xff]
    %v505 = vld [vmem:[%s471 + $0x108] sm:$0xff]
    %v506 = vld [vmem:[%s471 + $0x110] sm:$0xff]
    %v507 = vld [vmem:[%s471 + $0x118] sm:$0xff]
    %v508 = vld [vmem:[%s471 + $0x120] sm:$0xff]
    %v509 = vld [vmem:[%s471 + $0x128] sm:$0xff]
    %v510 = vld [vmem:[%s471 + $0x130] sm:$0xff]
    %v511 = vld [vmem:[%s471 + $0x138] sm:$0xff]
    %v512 = vld [vmem:[%s471 + $0x140] sm:$0xff]
    %v513 = vld [vmem:[%s471 + $0x148] sm:$0xff]
    %v514 = vld [vmem:[%s471 + $0x150] sm:$0xff]
    %v515 = vld [vmem:[%s471 + $0x158] sm:$0xff]
    %v516 = vld [vmem:[%s471 + $0x160] sm:$0xff]
    %v517 = vld [vmem:[%s471 + $0x168] sm:$0xff]
    %v518 = vld [vmem:[%s471 + $0x170] sm:$0xff]
    %v519 = vld [vmem:[%s471 + $0x178] sm:$0xff]
    %520 = vmatprep.subr.mxu0 0.0
    %521 = vmatpush1.msra.mxu0 %v472
    %522 = vmatprep.subr.mxu0 0.0
    %523 = vmatpush1.msra.mxu0 %v473
    %524 = vmatprep.subr.mxu0 0.0
    %525 = vmatpush1.msra.mxu0 %v474
    %526 = vmatprep.subr.mxu0 0.0
    %527 = vmatpush1.msra.mxu0 %v475
    %528 = vmatprep.subr.mxu0 0.0
    %529 = vmatpush1.msra.mxu0 %v476
    %530 = vmatprep.subr.mxu0 0.0
    %531 = vmatpush1.msra.mxu0 %v477
    %532 = vmatprep.subr.mxu0 0.0
    %533 = vmatpush1.msra.mxu0 %v478
    %534 = vmatprep.subr.mxu0 0.0
    %535 = vmatpush1.msra.mxu0 %v479
    %536 = vmatprep.subr.mxu0 0.0
    %537 = vmatpush1.msra.mxu0 %v480
    %538 = vmatprep.subr.mxu0 0.0
    %539 = vmatpush1.msra.mxu0 %v481
    %540 = vmatprep.subr.mxu0 0.0
    %541 = vmatpush1.msra.mxu0 %v482
    %542 = vmatprep.subr.mxu0 0.0
    %543 = vmatpush1.msra.mxu0 %v483
    %544 = vmatprep.subr.mxu0 0.0
    %545 = vmatpush1.msra.mxu0 %v484
    %546 = vmatprep.subr.mxu0 0.0
    %547 = vmatpush1.msra.mxu0 %v485
    %548 = vmatprep.subr.mxu0 0.0
    %549 = vmatpush1.msra.mxu0 %v486
    %550 = vmatprep.subr.mxu0 0.0
    %551 = vmatpush1.msra.mxu0 %v487
    %552 = vmatprep.subr.mxu0 0.0
    %553 = vmatpush1.msra.mxu0 %v488
    %554 = vmatprep.subr.mxu0 0.0
    %555 = vmatpush1.msra.mxu0 %v489
    %556 = vmatprep.subr.mxu0 0.0
    %557 = vmatpush1.msra.mxu0 %v490
    %558 = vmatprep.subr.mxu0 0.0
    %559 = vmatpush1.msra.mxu0 %v491
    %560 = vmatprep.subr.mxu0 0.0
    %561 = vmatpush1.msra.mxu0 %v492
    %562 = vmatprep.subr.mxu0 0.0
    %563 = vmatpush1.msra.mxu0 %v493
    %564 = vmatprep.subr.mxu0 0.0
    %565 = vmatpush1.msra.mxu0 %v494
    %566 = vmatprep.subr.mxu0 0.0
    %567 = vmatpush1.msra.mxu0 %v495
    %568 = vmatprep.subr.mxu0 0.0
    %569 = vmatpush1.msra.mxu0 %v496
    %570 = vmatprep.subr.mxu0 0.0
    %571 = vmatpush1.msra.mxu0 %v497
    %572 = vmatprep.subr.mxu0 0.0
    %573 = vmatpush1.msra.mxu0 %v498
    %574 = vmatprep.subr.mxu0 0.0
    %575 = vmatpush1.msra.mxu0 %v499
    %576 = vmatprep.subr.mxu0 0.0
    %577 = vmatpush1.msra.mxu0 %v500
    %578 = vmatprep.subr.mxu0 0.0
    %579 = vmatpush1.msra.mxu0 %v501
    %580 = vmatprep.subr.mxu0 0.0
    %581 = vmatpush1.msra.mxu0 %v502
    %582 = vmatprep.subr.mxu0 0.0
    %583 = vmatpush1.msra.mxu0 %v503
    %584 = vmatprep.mubr.f32.mxu0 %v460
    %585 = vmatmul.mubr.f32.gmra.mrb[0].mxu0 %v459
    %v586 = vpop.f32.mrb[0].mxu0
    %v587 = vadd.f32 0.0, %v586
    %v588 = vpop.f32.mrb[0].mxu0
    %589 = vmatprep.mubr.f32.mxu0 %v463
    %590 = vmatmul.mubr.f32.gmra.mrb[0].mxu0 %v462
    %v591 = vpop.f32.mrb[0].mxu0
    %v592 = vadd.f32 0.0, %v591
    %v593 = vpop.f32.mrb[0].mxu0
    %594 = vmatprep.mubr.f32.mxu0 %v466
    %595 = vmatmul.mubr.f32.gmra.mrb[0].mxu0 %v465
    %v596 = vpop.f32.mrb[0].mxu0
    %v597 = vadd.f32 0.0, %v596
    %v598 = vpop.f32.mrb[0].mxu0
    %599 = vmatprep.mubr.f32.mxu0 %v469
    %600 = vmatmul.mubr.f32.gmra.mrb[0].mxu0 %v468
    %v601 = vpop.f32.mrb[0].mxu0
    %v602 = vadd.f32 0.0, %v601
    %v603 = vpop.f32.mrb[0].mxu0
    %604 = vdwg.mxu0
    %605 = vmatprep.subr.mxu0 0.0
    %606 = vmatpush1.msra.mxu0 %v504
    %607 = vmatprep.subr.mxu0 0.0
    %608 = vmatpush1.msra.mxu0 %v505
    %609 = vmatprep.subr.mxu0 0.0
    %610 = vmatpush1.msra.mxu0 %v506
    %611 = vmatprep.subr.mxu0 0.0
    %612 = vmatpush1.msra.mxu0 %v507
    %613 = vmatprep.subr.mxu0 0.0
    %614 = vmatpush1.msra.mxu0 %v508
    %615 = vmatprep.subr.mxu0 0.0
    %616 = vmatpush1.msra.mxu0 %v509
    %617 = vmatprep.subr.mxu0 0.0
    %618 = vmatpush1.msra.mxu0 %v510
    %619 = vmatprep.subr.mxu0 0.0
    %620 = vmatpush1.msra.mxu0 %v511
    %621 = vmatprep.subr.mxu0 0.0
    %622 = vmatpush1.msra.mxu0 %v512
    %623 = vmatprep.subr.mxu0 0.0
    %624 = vmatpush1.msra.mxu0 %v513
    %625 = vmatprep.subr.mxu0 0.0
    %626 = vmatpush1.msra.mxu0 %v514
    %627 = vmatprep.subr.mxu0 0.0
    %628 = vmatpush1.msra.mxu0 %v515
    %629 = vmatprep.subr.mxu0 0.0
    %630 = vmatpush1.msra.mxu0 %v516
    %631 = vmatprep.subr.mxu0 0.0
    %632 = vmatpush1.msra.mxu0 %v517
    %633 = vmatprep.subr.mxu0 0.0
    %634 = vmatpush1.msra.mxu0 %v518
    %635 = vmatprep.subr.mxu0 0.0
    %636 = vmatpush1.msra.mxu0 %v519
    %637 = vmatprep.subr.mxu0 0.0
    %638 = vmatpush1.msra.mxu0 0.0
    %639 = vmatprep.subr.mxu0 0.0
    %640 = vmatpush1.msra.mxu0 0.0
    %641 = vmatprep.subr.mxu0 0.0
    %642 = vmatpush1.msra.mxu0 0.0
    %643 = vmatprep.subr.mxu0 0.0
    %644 = vmatpush1.msra.mxu0 0.0
    %645 = vmatprep.subr.mxu0 0.0
    %646 = vmatpush1.msra.mxu0 0.0
    %647 = vmatprep.subr.mxu0 0.0
    %648 = vmatpush1.msra.mxu0 0.0
    %649 = vmatprep.subr.mxu0 0.0
    %650 = vmatpush1.msra.mxu0 0.0
    %651 = vmatprep.subr.mxu0 0.0
    %652 = vmatpush1.msra.mxu0 0.0
    %653 = vmatprep.subr.mxu0 0.0
    %654 = vmatpush1.msra.mxu0 0.0
    %655 = vmatprep.subr.mxu0 0.0
    %656 = vmatpush1.msra.mxu0 0.0
    %657 = vmatprep.subr.mxu0 0.0
    %658 = vmatpush1.msra.mxu0 0.0
    %659 = vmatprep.subr.mxu0 0.0
    %660 = vmatpush1.msra.mxu0 0.0
    %661 = vmatprep.subr.mxu0 0.0
    %662 = vmatpush1.msra.mxu0 0.0
    %663 = vmatprep.subr.mxu0 0.0
    %664 = vmatpush1.msra.mxu0 0.0
    %665 = vmatprep.subr.mxu0 0.0
    %666 = vmatpush1.msra.mxu0 0.0
    %667 = vmatprep.subr.mxu0 0.0
    %668 = vmatpush1.msra.mxu0 0.0
    %669 = vmatprep.mubr.f32.mxu0 0.0
    %670 = vmatmul.mubr.f32.gmra.mrb[0].mxu0 %v461
    %v671 = vpop.f32.mrb[0].mxu0
    %v672 = vadd.f32 %v587, %v671
    %v673 = vpop.f32.mrb[0].mxu0
    %674 = vmatprep.mubr.f32.mxu0 0.0
    %675 = vmatmul.mubr.f32.gmra.mrb[0].mxu0 %v464
    %v676 = vpop.f32.mrb[0].mxu0
    %v677 = vadd.f32 %v592, %v676
    %v678 = vpop.f32.mrb[0].mxu0
    %679 = vmatprep.mubr.f32.mxu0 0.0
    %680 = vmatmul.mubr.f32.gmra.mrb[0].mxu0 %v467
    %v681 = vpop.f32.mrb[0].mxu0
    %v682 = vadd.f32 %v597, %v681
    %v683 = vpop.f32.mrb[0].mxu0
    %684 = vmatprep.mubr.f32.mxu0 0.0
    %685 = vmatmul.mubr.f32.gmra.mrb[0].mxu0 %v470
    %v686 = vpop.f32.mrb[0].mxu0
    %v687 = vadd.f32 %v602, %v686
    %v688 = vpop.f32.mrb[0].mxu0
    %689 = vdwg.mxu0
    %s690 = scalar_lea.vmem %s2, 1
    %v691 = vld [vmem:[%s690] sm:$0x1]
    %v693 = vlaneseq
    %v694 = vshrl.u32 %v693, 7
    %v695 = vsub.s32 0, %v694
    %v696 = vrot.slane %v691, %v695
    %v698 = vadd.f32 %v672, %v696
    %v699 = vadd.f32 %v677, %v696
    %v700 = vadd.f32 %v682, %v696
    %v701 = vadd.f32 %v687, %v696
    %702 = vadd.xlane.f32.xlu0 %v698
    %v703 = vpop.xlane.xlu0 %702
    %704 = vadd.xlane.f32.xlu0 %v699
    %v705 = vpop.xlane.xlu0 %704
    %706 = vadd.xlane.f32.xlu0 %v700
    %v707 = vpop.xlane.xlu0 %706
    %708 = vadd.xlane.f32.xlu0 %v701
    %v709 = vpop.xlane.xlu0 %708
    %v710 = vmul.f32 %v703, %v348
    %v711 = vmul.f32 %v705, %v348
    %v712 = vmul.f32 %v707, %v348
    %v713 = vmul.f32 %v709, %v348
    %v714 = vmul.f32 %v698, %v698
    %v715 = vmul.f32 %v699, %v699
    %v716 = vmul.f32 %v700, %v700
    %v717 = vmul.f32 %v701, %v701
    %718 = vadd.xlane.f32.xlu0 %v714
    %v719 = vpop.xlane.xlu0 %718
    %720 = vadd.xlane.f32.xlu0 %v715
    %v721 = vpop.xlane.xlu0 %720
    %722 = vadd.xlane.f32.xlu0 %v716
    %v723 = vpop.xlane.xlu0 %722
    %724 = vadd.xlane.f32.xlu0 %v717
    %v725 = vpop.xlane.xlu0 %724
    %v726 = vmul.f32 %v719, %v348
    %v727 = vmul.f32 %v721, %v348
    %v728 = vmul.f32 %v723, %v348
    %v729 = vmul.f32 %v725, %v348
    %v730 = vmul.f32 %v710, %v710
    %v731 = vmul.f32 %v711, %v711
    %v732 = vmul.f32 %v712, %v712
    %v733 = vmul.f32 %v713, %v713
    %v734 = vsub.f32 %v726, %v730
    %v735 = vsub.f32 %v727, %v731
    %v736 = vsub.f32 %v728, %v732
    %v737 = vsub.f32 %v729, %v733
    %v738 = vsub.f32 %v698, %v710
    %v739 = vsub.f32 %v699, %v711
    %v740 = vsub.f32 %v700, %v712
    %v741 = vsub.f32 %v701, %v713
    %v742 = vmax.f32 %v734, 0.0
    %v743 = vmax.f32 %v735, 0.0
    %v744 = vmax.f32 %v736, 0.0
    %v745 = vmax.f32 %v737, 0.0
    %v746 = vadd.f32 %v742, 1e-05
    %v747 = vadd.f32 %v743, 1e-05
    %v748 = vadd.f32 %v744, 1e-05
    %v749 = vadd.f32 %v745, 1e-05
    %v750 = vrsqrt.pop %v746
    %v751 = vrsqrt.pop %v747
    %v752 = vrsqrt.pop %v748
    %v753 = vrsqrt.pop %v749
    %v754 = vmul.f32 %v738, %v750
    %v755 = vmul.f32 %v739, %v751
    %v756 = vmul.f32 %v740, %v752
    %v757 = vmul.f32 %v741, %v753
    %s758 = scalar_lea.vmem %s3, 1
    %v759 = vld [vmem:[%s758] sm:$0x1]
    %v761 = vlaneseq
    %v762 = vshrl.u32 %v761, 7
    %v763 = vsub.s32 0, %v762
    %v764 = vrot.slane %v759, %v763
    %v766 = vmul.f32 %v754, %v764
    %v767 = vmul.f32 %v755, %v764
    %v768 = vmul.f32 %v756, %v764
    %v769 = vmul.f32 %v757, %v764
    %s770 = scalar_lea.vmem %s4, 1
    %v771 = vld [vmem:[%s770] sm:$0x1]
    %v773 = vlaneseq
    %v774 = vshrl.u32 %v773, 7
    %v775 = vsub.s32 0, %v774
    %v776 = vrot.slane %v771, %v775
    %v778 = vadd.f32 %v766, %v776
    %v779 = vadd.f32 %v767, %v776
    %v780 = vadd.f32 %v768, %v776
    %v781 = vadd.f32 %v769, %v776
    %v782 = vld [vmem:[#allocation3] sm:$0xff]
    %v783 = vld [vmem:[#allocation3 + $0x8] sm:$0xff]
    %v784 = vld [vmem:[#allocation3 + $0x10] sm:$0xff]
    %v785 = vld [vmem:[#allocation3 + $0x18] sm:$0xff]
    %v786 = vadd.f32 %v782, %v778
    %v787 = vadd.f32 %v783, %v779
    %v788 = vadd.f32 %v784, %v780
    %v789 = vadd.f32 %v785, %v781
    %790 = vst [vmem:[#allocation8] sm:$0xff] %v786
    %791 = vst [vmem:[#allocation8 + $0x8] sm:$0xff] %v787
    %792 = vst [vmem:[#allocation8 + $0x10] sm:$0xff] %v788
    %793 = vst [vmem:[#allocation8 + $0x18] sm:$0xff] %v789
    // Predicated region
    $region30: #{tpu_custom_call.1} parent=1 // pred_check
      _
    $region31: #{tpu_custom_call.1} parent=1 // pred_check_branch
      %795 = sbr.rel (0) target = $region33
    $region32: #{tpu_custom_call.1} parent=1 // pred_region
      %s797 = ssub.s32 512, 512
      %798 = vsyncadd [#allocation5], %s797
      %s799 = sshll.u32 [#allocation8], 4
      %s800 = int_to_ptr.vmem [resolvable:$true] %s799
      %805 = dma.vmem_to_hbm [thread:$0]  %s800, 512, %s5, [#allocation5], 128, 128, 8
    $region33: #{tpu_custom_call.1} parent=1 // pred_fallthru
      _
    // Predicated region
    $region34: #{tpu_custom_call.1} parent=1 // pred_check
      _
    $region35: #{tpu_custom_call.1} parent=1 // pred_check_branch
      %807 = sbr.rel (0) target = $region37
    $region36: #{tpu_custom_call.1} parent=1 // pred_region
      %808 = dma.done [#allocation5], 512
    $region37: #{tpu_custom_call.1} parent=1 // pred_fallthru
      _
    %809 = vsyncpa [#allocation4], 1
    %810 = vsyncpa [#allocation7], 1
    %811 = vsyncpa [#allocation5], 1

</llo_original>
